<compile_context>
chip_gen: v7x
topology: tpu7x:2x2x1
jax: 0.10.0
libtpu: 0.0.40
codegen_flags: <defaults>
</compile_context>

<pallas_src>
import math
import jax
import jax.numpy as jnp
from jax.experimental import pallas as pl
from jax.experimental.pallas import tpu as pltpu


# -----------------------------------------------------------------------------
# Mask construction (port of create_masks, sequential order, no input_degrees)
# -----------------------------------------------------------------------------
def create_masks(input_size, hidden_size, n_hidden):
    # NOTE: `(arange(input_size) % input_size) - 1` — mod binds before the -1; this
    # matches the original PyTorch code exactly (reads like a bug but is intended).
    # NOTE: `% (input_size - 1)` divides by zero for input_size == 1 (same as original).
    degrees = [jnp.arange(input_size)]
    for _ in range(n_hidden + 1):
        degrees.append(jnp.arange(hidden_size) % (input_size - 1))
    degrees.append((jnp.arange(input_size) % input_size) - 1)
    masks = []
    for d0, d1 in zip(degrees[:-1], degrees[1:]):
        masks.append((d1[:, None] >= d0[None, :]).astype(jnp.float32))
    return masks, degrees[0]


# -----------------------------------------------------------------------------
# Pallas kernel: fused MADE forward for one batch tile, batch on the lane axis
# -----------------------------------------------------------------------------
def made_kernel(x_ref, w0_ref, b0_ref, w1_ref, b1_ref, w2_ref, b2_ref,
                u_ref, ldj_ref):
    D = u_ref.shape[0]
    xT = x_ref[...]                                                 # (D, TB) f32
    # MaskedLinear(D -> H): bf16 operands on the MXU, f32 accumulation; bias
    # broadcasts along lanes from (H, 1).
    h = jnp.dot(w0_ref[...], xT.astype(jnp.bfloat16),
                preferred_element_type=jnp.float32) + b0_ref[...]   # (H, TB)
    # ReLU -> MaskedLinear(H -> H)
    h = jnp.maximum(h, 0.0).astype(jnp.bfloat16)
    h = jnp.dot(w1_ref[...], h, preferred_element_type=jnp.float32) + b1_ref[...]
    # ReLU -> merged MaskedLinear(H -> 2D): one matmul, m/loga split on sublanes.
    h = jnp.maximum(h, 0.0).astype(jnp.bfloat16)
    out = jnp.dot(w2_ref[...], h, preferred_element_type=jnp.float32) + b2_ref[...]
    # Sublane split (free for D a multiple of 8; still correct otherwise).
    m = out[:D, :]
    neg_loga = -out[D:, :]
    # Epilogue rides free VPU/EUP slots; stores are lane-dense (TB multiple of 128).
    u_ref[...] = (xT - m) * jnp.exp(neg_loga)
    ldj_ref[...] = neg_loga


# -----------------------------------------------------------------------------
# Wrapper: tile selection, VMEM budget, pallas_call
# -----------------------------------------------------------------------------
def _choose_tb(B, tb):
    """Batch rides the lane dim: TB must be a multiple of 128 or the full extent.
    Pick the largest multiple of 128 <= tb that divides B (no padding copies)."""
    if B <= 128 or B % 128 != 0:
        return B                      # single full-extent block along the lane axis
    cap = max(128, (min(tb, B) // 128) * 128)
    for cand in range(cap, 127, -128):
        if B % cand == 0:
            return cand
    return B


def _vmem_limit_bytes(TB, D, H):
    weights = 2 * (H * D + H * H + 2 * D * H)        # resident bf16 weights
    biases = 4 * (2 * H + 2 * D)                     # f32 biases
    io_tiles = 4 * (3 * D * TB) * 2                  # double-buffered f32 x/u/ldj tiles
    act = 4 * max(H, 2 * D) * TB * 3                 # f32/bf16 activation temporaries
    need = 2 * (weights + biases + io_tiles + act)   # 2x slack for compiler scratch
    # Modest floor, capped below v7x's 64 MiB physical VMEM. (On v5e/v6e with 128 MiB
    # physical this cap could be raised toward ~100 MiB if H/D are ever scaled up.)
    return min(max(need, 8 * 1024 * 1024), 48 * 1024 * 1024)


def made_forward(x, params, tb=512):
    """x: (B, D) f32. params: pre-masked bf16 weights in (out, in) layout,
    f32 biases shaped (out, 1). Returns (u, log_abs_det_jacobian), each (B, D)."""
    B, D = x.shape
    H = params["w0"].shape[0]
    TB = _choose_tb(B, tb)
    grid = (B // TB,)

    xT = x.T                                         # (D, B) — layout plumbing
    batch_spec = pl.BlockSpec((D, TB), lambda i: (0, i))
    # Constant index_map => DMA'd once, VMEM-resident across all grid steps.
    # TODO(synk): if H/D are scaled up, add pipeline_mode=pl.Buffered(1) here to
    # single-buffer these fetch-once weights and halve their resident VMEM.
    const = lambda shape: pl.BlockSpec(shape, lambda i: (0, 0))

    out_shapes = (
        jax.ShapeDtypeStruct((D, B), jnp.float32),   # u^T
        jax.ShapeDtypeStruct((D, B), jnp.float32),   # log_abs_det_jacobian^T
    )
    uT, ldjT = pl.pallas_call(
        made_kernel,
        out_shape=out_shapes,
        grid=grid,
        in_specs=[
            batch_spec,
            const((H, D)), const((H, 1)),
            const((H, H)), const((H, 1)),
            const((2 * D, H)), const((2 * D, 1)),
        ],
        out_specs=(batch_spec, batch_spec),
        compiler_params=pltpu.CompilerParams(
            dimension_semantics=("parallel",),
            vmem_limit_bytes=_vmem_limit_bytes(TB, D, H),
        ),
    )(xT, params["w0"], params["b0"], params["w1"], params["b1"],
      params["w2"], params["b2"])

    return uT.T, ldjT.T


# -----------------------------------------------------------------------------
# Deterministic parameter setup + pure-JAX reference (mirrors kernel dtypes)
# -----------------------------------------------------------------------------
def init_made_params(key, input_size, hidden_size, n_hidden=1):
    assert n_hidden == 1, "this synthetic kernel instantiates n_hidden=1"
    masks, _ = create_masks(input_size, hidden_size, n_hidden)
    m0, m1, m_last = masks[0], masks[1], masks[2]       # (H,D), (H,H), (D,H)

    k0, k1, k2, k3, k4, k5 = jax.random.split(key, 6)

    def lin_init(kw, kb, out_f, in_f):
        bound = 1.0 / math.sqrt(in_f)
        w = jax.random.uniform(kw, (out_f, in_f), jnp.float32, -bound, bound)
        b = jax.random.uniform(kb, (out_f,), jnp.float32, -bound, bound)
        return w, b

    W0, b0 = lin_init(k0, k1, hidden_size, input_size)
    W1, b1 = lin_init(k2, k3, hidden_size, hidden_size)
    W2, b2 = lin_init(k4, k5, 2 * input_size, hidden_size)

    mask_last = jnp.concatenate([m_last, m_last], axis=0)    # masks[-1].repeat(2, 1)
    # Pre-mask; keep natural (out, in) orientation (batch-on-lanes kernel layout);
    # bf16 weights, f32 biases shaped (out, 1) so they broadcast along lanes.
    return {
        "w0": (W0 * m0).astype(jnp.bfloat16), "b0": b0[:, None],
        "w1": (W1 * m1).astype(jnp.bfloat16), "b1": b1[:, None],
        "w2": (W2 * mask_last).astype(jnp.bfloat16), "b2": b2[:, None],
    }


def made_reference(x, p):
    # Pure-JAX reference mirroring the kernel's transposed compute and dtypes.
    D = x.shape[1]
    xT = x.T
    h = jnp.dot(p["w0"], xT.astype(jnp.bfloat16),
                preferred_element_type=jnp.float32) + p["b0"]
    h = jnp.maximum(h, 0.0).astype(jnp.bfloat16)
    h = jnp.dot(p["w1"], h, preferred_element_type=jnp.float32) + p["b1"]
    h = jnp.maximum(h, 0.0).astype(jnp.bfloat16)
    out = jnp.dot(p["w2"], h, preferred_element_type=jnp.float32) + p["b2"]
    m, loga = out[:D], out[D:]
    return ((xT - m) * jnp.exp(-loga)).T, (-loga).T


if __name__ == "__main__":
    B, D, H = 1024, 8, 32   # batch, input_size, hidden_size (n_hidden = 1)
    key = jax.random.PRNGKey(0)
    kx, kp = jax.random.split(key)
    x = jax.random.normal(kx, (B, D), dtype=jnp.float32)
    params = init_made_params(kp, D, H, n_hidden=1)

    u, ldj = made_forward(x, params, tb=512)   # 2-step batch grid (dual-TC on v7x)
    jax.block_until_ready((u, ldj))

    u_ref, ldj_ref = made_reference(x, params)
    assert u.shape == (B, D) and ldj.shape == (B, D)
    assert jnp.allclose(u, u_ref, atol=2e-3, rtol=2e-3)
    assert jnp.allclose(ldj, ldj_ref, atol=2e-3, rtol=2e-3)
    print("KERNEL_OK")
</pallas_src>

<mosaic_0001>
module attributes {stable_mosaic.version = 11 : i64} {
  func.func @made_kernel(%arg0: i32, %arg1: memref<8x512xf32, #tpu.memory_space<vmem>>, %arg2: memref<32x8xbf16, #tpu.memory_space<vmem>>, %arg3: memref<32x1xf32, #tpu.memory_space<vmem>>, %arg4: memref<32x32xbf16, #tpu.memory_space<vmem>>, %arg5: memref<32x1xf32, #tpu.memory_space<vmem>>, %arg6: memref<16x32xbf16, #tpu.memory_space<vmem>>, %arg7: memref<16x1xf32, #tpu.memory_space<vmem>>, %arg8: memref<8x512xf32, #tpu.memory_space<vmem>>, %arg9: memref<8x512xf32, #tpu.memory_space<vmem>>) attributes {dimension_semantics = [#tpu.dimension_semantics<parallel>], iteration_bounds = array<i64: 2>, scalar_prefetch = 0 : i64, scratch_operands = 0 : i64, tpu.core_type = #tpu.core_type<tc>, window_params = [{transform_indices = @transform_0, window_bounds = array<i64: 8, 512>}, {pipeline_mode = #tpu.pipeline_mode<synchronous>, transform_indices = @transform_1, window_bounds = array<i64: 32, 8>}, {pipeline_mode = #tpu.pipeline_mode<synchronous>, transform_indices = @transform_2, window_bounds = array<i64: 32, 1>}, {pipeline_mode = #tpu.pipeline_mode<synchronous>, transform_indices = @transform_3, window_bounds = array<i64: 32, 32>}, {pipeline_mode = #tpu.pipeline_mode<synchronous>, transform_indices = @transform_4, window_bounds = array<i64: 32, 1>}, {pipeline_mode = #tpu.pipeline_mode<synchronous>, transform_indices = @transform_5, window_bounds = array<i64: 16, 32>}, {pipeline_mode = #tpu.pipeline_mode<synchronous>, transform_indices = @transform_6, window_bounds = array<i64: 16, 1>}, {transform_indices = @transform_7, window_bounds = array<i64: 8, 512>}, {transform_indices = @transform_8, window_bounds = array<i64: 8, 512>}]} {
    %c0 = arith.constant 0 : index
    %c0_0 = arith.constant 0 : index
    %0 = vector.load %arg1[%c0, %c0_0] : memref<8x512xf32, #tpu.memory_space<vmem>>, vector<8x512xf32>
    %c0_1 = arith.constant 0 : index
    %c0_2 = arith.constant 0 : index
    %1 = vector.load %arg2[%c0_1, %c0_2] : memref<32x8xbf16, #tpu.memory_space<vmem>>, vector<32x8xbf16>
    %2 = arith.truncf %0 : vector<8x512xf32> to vector<8x512xbf16>
    %cst = arith.constant dense<0.000000e+00> : vector<32x512xf32>
    %3 = tpu.matmul %1, %2, %cst {dimension_numbers = #tpu.dot_dimension_numbers<[1], [0], [0], [1], [0, 0, 1, 1], [], []>} : vector<32x8xbf16>, vector<8x512xbf16>, vector<32x512xf32> -> vector<32x512xf32>
    %c0_3 = arith.constant 0 : index
    %c0_4 = arith.constant 0 : index
    %4 = vector.load %arg3[%c0_3, %c0_4] : memref<32x1xf32, #tpu.memory_space<vmem>>, vector<32x1xf32>
    %5 = vector.broadcast %4 : vector<32x1xf32> to vector<32x512xf32>
    %6 = arith.addf %3, %5 : vector<32x512xf32>
    %cst_5 = arith.constant 0.000000e+00 : f32
    %7 = vector.broadcast %cst_5 : f32 to vector<32x512xf32>
    %8 = arith.maximumf %6, %7 : vector<32x512xf32>
    %9 = arith.truncf %8 : vector<32x512xf32> to vector<32x512xbf16>
    %c0_6 = arith.constant 0 : index
    %c0_7 = arith.constant 0 : index
    %10 = vector.load %arg4[%c0_6, %c0_7] : memref<32x32xbf16, #tpu.memory_space<vmem>>, vector<32x32xbf16>
    %cst_8 = arith.constant dense<0.000000e+00> : vector<32x512xf32>
    %11 = tpu.matmul %10, %9, %cst_8 {dimension_numbers = #tpu.dot_dimension_numbers<[1], [0], [0], [1], [0, 0, 1, 1], [], []>} : vector<32x32xbf16>, vector<32x512xbf16>, vector<32x512xf32> -> vector<32x512xf32>
    %c0_9 = arith.constant 0 : index
    %c0_10 = arith.constant 0 : index
    %12 = vector.load %arg5[%c0_9, %c0_10] : memref<32x1xf32, #tpu.memory_space<vmem>>, vector<32x1xf32>
    %13 = vector.broadcast %12 : vector<32x1xf32> to vector<32x512xf32>
    %14 = arith.addf %11, %13 : vector<32x512xf32>
    %cst_11 = arith.constant 0.000000e+00 : f32
    %15 = vector.broadcast %cst_11 : f32 to vector<32x512xf32>
    %16 = arith.maximumf %14, %15 : vector<32x512xf32>
    %17 = arith.truncf %16 : vector<32x512xf32> to vector<32x512xbf16>
    %c0_12 = arith.constant 0 : index
    %c0_13 = arith.constant 0 : index
    %18 = vector.load %arg6[%c0_12, %c0_13] : memref<16x32xbf16, #tpu.memory_space<vmem>>, vector<16x32xbf16>
    %cst_14 = arith.constant dense<0.000000e+00> : vector<16x512xf32>
    %19 = tpu.matmul %18, %17, %cst_14 {dimension_numbers = #tpu.dot_dimension_numbers<[1], [0], [0], [1], [0, 0, 1, 1], [], []>} : vector<16x32xbf16>, vector<32x512xbf16>, vector<16x512xf32> -> vector<16x512xf32>
    %c0_15 = arith.constant 0 : index
    %c0_16 = arith.constant 0 : index
    %20 = vector.load %arg7[%c0_15, %c0_16] : memref<16x1xf32, #tpu.memory_space<vmem>>, vector<16x1xf32>
    %21 = vector.broadcast %20 : vector<16x1xf32> to vector<16x512xf32>
    %22 = arith.addf %19, %21 : vector<16x512xf32>
    %23 = vector.extract_strided_slice %22 {offsets = [0, 0], sizes = [8, 512], strides = [1, 1]} : vector<16x512xf32> to vector<8x512xf32>
    %24 = vector.extract_strided_slice %22 {offsets = [8, 0], sizes = [8, 512], strides = [1, 1]} : vector<16x512xf32> to vector<8x512xf32>
    %cst_17 = arith.constant 0.000000e+00 : f32
    %25 = vector.broadcast %cst_17 : f32 to vector<8x512xf32>
    %26 = arith.subf %25, %24 : vector<8x512xf32>
    %27 = arith.subf %0, %23 : vector<8x512xf32>
    %28 = math.exp %26 : vector<8x512xf32>
    %29 = arith.mulf %27, %28 : vector<8x512xf32>
    %c0_18 = arith.constant 0 : index
    %c0_19 = arith.constant 0 : index
    %30 = vector.load %arg8[%c0_18, %c0_19] : memref<8x512xf32, #tpu.memory_space<vmem>>, vector<8x512xf32>
    tpu.vector_store %arg8[%c0_18, %c0_19], %29 {strides = array<i32>} : memref<8x512xf32, #tpu.memory_space<vmem>>, vector<8x512xf32>,
    %c0_20 = arith.constant 0 : index
    %c0_21 = arith.constant 0 : index
    %31 = vector.load %arg9[%c0_20, %c0_21] : memref<8x512xf32, #tpu.memory_space<vmem>>, vector<8x512xf32>
    tpu.vector_store %arg9[%c0_20, %c0_21], %26 {strides = array<i32>} : memref<8x512xf32, #tpu.memory_space<vmem>>, vector<8x512xf32>,
    return
  }
  func.func @transform_0(%arg0: i32) -> (i32, i32) {
    %c0_i32 = arith.constant 0 : i32
    %c0_i32_0 = arith.constant 0 : i32
    return %c0_i32, %arg0 : i32, i32
  }
  func.func @transform_1(%arg0: i32) -> (i32, i32) {
    %c0_i32 = arith.constant 0 : i32
    %c0_i32_0 = arith.constant 0 : i32
    %c0_i32_1 = arith.constant 0 : i32
    return %c0_i32, %c0_i32_0 : i32, i32
  }
  func.func @transform_2(%arg0: i32) -> (i32, i32) {
    %c0_i32 = arith.constant 0 : i32
    %c0_i32_0 = arith.constant 0 : i32
    %c0_i32_1 = arith.constant 0 : i32
    return %c0_i32, %c0_i32_0 : i32, i32
  }
  func.func @transform_3(%arg0: i32) -> (i32, i32) {
    %c0_i32 = arith.constant 0 : i32
    %c0_i32_0 = arith.constant 0 : i32
    %c0_i32_1 = arith.constant 0 : i32
    return %c0_i32, %c0_i32_0 : i32, i32
  }
  func.func @transform_4(%arg0: i32) -> (i32, i32) {
    %c0_i32 = arith.constant 0 : i32
    %c0_i32_0 = arith.constant 0 : i32
    %c0_i32_1 = arith.constant 0 : i32
    return %c0_i32, %c0_i32_0 : i32, i32
  }
  func.func @transform_5(%arg0: i32) -> (i32, i32) {
    %c0_i32 = arith.constant 0 : i32
    %c0_i32_0 = arith.constant 0 : i32
    %c0_i32_1 = arith.constant 0 : i32
    return %c0_i32, %c0_i32_0 : i32, i32
  }
  func.func @transform_6(%arg0: i32) -> (i32, i32) {
    %c0_i32 = arith.constant 0 : i32
    %c0_i32_0 = arith.constant 0 : i32
    %c0_i32_1 = arith.constant 0 : i32
    return %c0_i32, %c0_i32_0 : i32, i32
  }
  func.func @transform_7(%arg0: i32) -> (i32, i32) {
    %c0_i32 = arith.constant 0 : i32
    %c0_i32_0 = arith.constant 0 : i32
    return %c0_i32, %arg0 : i32, i32
  }
  func.func @transform_8(%arg0: i32) -> (i32, i32) {
    %c0_i32 = arith.constant 0 : i32
    %c0_i32_0 = arith.constant 0 : i32
    return %c0_i32, %arg0 : i32, i32
  }
}

</mosaic_0001>

<llo_original>
// kernel: tpu_custom_call.1
$region0: #{tpu_custom_call.1}
  #allocation0 [shape = 'u32[]', space=smem, size = 0x4, offset = 0x4, fixed_abs, tag = 'smem constant byte address 0x4 - core index']
  #allocation1 [shape = 'u32[144,128]{1,0:T(1,128)}', space=vmem, size = 0x12000, scoped, tag = 'internal scratch']
  %s0 = inlined_call_operand.vmem [shape: f32[8,1024], index: 0, kind: input, shape index: {}]
  %s1 = inlined_call_operand.vmem [shape: bf16[32,8], index: 1, kind: input, shape index: {}]
  %s2 = inlined_call_operand.vmem [shape: f32[32,1], index: 2, kind: input, shape index: {}]
  %s3 = inlined_call_operand.vmem [shape: bf16[32,32], index: 3, kind: input, shape index: {}]
  %s4 = inlined_call_operand.vmem [shape: f32[32,1], index: 4, kind: input, shape index: {}]
  %s5 = inlined_call_operand.vmem [shape: bf16[16,32], index: 5, kind: input, shape index: {}]
  %s6 = inlined_call_operand.vmem [shape: f32[16,1], index: 6, kind: input, shape index: {}]
  %s7 = inlined_call_operand.hbm [shape: f32[8,1024], index: 7, kind: output, shape index: {0}]
  %s8 = inlined_call_operand.hbm [shape: f32[8,1024], index: 8, kind: output, shape index: {1}]
  %9 = xla_tuple %s7, %s8
  %s10 = sld [smem:[#allocation0]]
  $region69: #{tpu_custom_call.1} parent=0
    _
  %s12 = ssub.s32 1, %s10
  %s13 = scalar_select 0, %s12, %s10
  $region1: #{tpu_custom_call.1} parent=0
    #allocation2 [shape = 'u8[32768]{0}', space=vmem, size = 0x8000, scoped, tag = 'output window, operand 0']
    #allocation3 [shape = 's32[2]{0}', space=sflag, size = 0x8, scoped, tag = 'scoped memory for tpu_custom_call.1']
    #allocation4 [shape = 'u8[32768]{0}', space=vmem, size = 0x8000, scoped, tag = 'output window, operand 1']
    #allocation5 [shape = 's32[2]{0}', space=sflag, size = 0x8, scoped, tag = 'scoped memory for tpu_custom_call.1']
    %14 = vsyncpa [#allocation3], 0
    %s15 = scalar_lea.sflag [#allocation3], 1
    %16 = vsyncpa %s15, 0
    %17 = vsyncpa [#allocation5], 0
    %s18 = scalar_lea.sflag [#allocation5], 1
    %19 = vsyncpa %s18, 0
    loop: start=0, step=1, limit=4
    $region2: #{tpu_custom_call.1} parent=1 // loop_pre_header
      _
    $region3: #{tpu_custom_call.1} parent=1 // loop_header
      %s21 = sphi 0, %s25
      %p22 = scmp.ge.s32.totalorder %s21, 4
      %s31 = sphi 0, %s33
      %s34 = sphi 0, %s31
      %s35 = sphi 0, %s34
      %s51 = sphi 0, %s35
      %s55 = sphi 0, %s55
      %s57 = sphi 0, %s55
      %s58 = sphi 0, %s57
      %s72 = sphi 0, %s58
      %s76 = sphi 0, %s76
      %s78 = sphi 0, %s76
      %s79 = sphi 0, %s78
      %s93 = sphi 0, %s79
      %s97 = sphi 0, %s97
      %s99 = sphi 0, %s97
      %s100 = sphi 0, %s99
      %s114 = sphi 0, %s100
      %s118 = sphi 0, %s118
      %s120 = sphi 0, %s118
      %s121 = sphi 0, %s120
      %s135 = sphi 0, %s121
      %s139 = sphi 0, %s139
      %s141 = sphi 0, %s139
      %s142 = sphi 0, %s141
      %s156 = sphi 0, %s142
      %s160 = sphi 0, %s160
      %s162 = sphi 0, %s160
      %s163 = sphi 0, %s162
      %s177 = sphi 0, %s163
      %s183 = sphi 0, %s185
      %s186 = sphi 0, %s183
      %s187 = sphi 0, %s186
      %s203 = sphi 0, %s187
      %s209 = sphi 0, %s211
      %s212 = sphi 0, %s209
      %s213 = sphi 0, %s212
      %s229 = sphi 0, %s213
    $region4: #{tpu_custom_call.1} parent=1 // loop_header_branch
      %24 = sbr.rel (%p22) target = $region8
    $region5: #{tpu_custom_call.1} parent=1 // loop_body
      %s26 = ssub.s32 %s21, 1
      %s27 = ssub.s32 %s21, 2
      %s28 = sadd.s32 %s21, 1
      %s29 = ssub.s32 %s21, %s28
      %p30 = scmp.eq.s32.totalorder %s29, 0
      %s32 = sadd.s32 %s31, 1
      %s33 = scalar_select %p30, %s31, %s32
      %p36 = pneg %p30
      %p37 = scmp.eq.s32.totalorder %s21, 1
      %p38 = por %p36, %p37
      %p39 = scmp.ne.s32.totalorder %s31, %s34
      %p40 = scmp.eq.s32.totalorder %s21, 0
      %p41 = por %p39, %p40
      %p42 = scmp.ne.s32.totalorder %s31, %s34
      %p43 = scmp.eq.s32.totalorder %s26, 1
      %p44 = por %p42, %p43
      %p45 = scmp.ne.s32.totalorder %s34, %s35
      %p46 = scmp.eq.s32.totalorder %s26, 0
      %p47 = por %p45, %p46
      %p48 = scmp.ne.s32.totalorder %s34, %s35
      %p49 = scmp.eq.s32.totalorder %s27, 1
      %p50 = por %p48, %p49
      %p52 = scmp.ne.s32.totalorder %s35, %s51
      %p53 = scmp.eq.s32.totalorder %s27, 0
      %p54 = por %p52, %p53
      %s56 = sadd.s32 %s55, 1
      %p59 = scmp.eq.s32.totalorder %s21, 1
      %p60 = scmp.ne.s32.totalorder %s55, %s57
      %p61 = scmp.eq.s32.totalorder %s21, 0
      %p62 = por %p60, %p61
      %p63 = scmp.ne.s32.totalorder %s55, %s57
      %p64 = scmp.eq.s32.totalorder %s26, 1
      %p65 = por %p63, %p64
      %p66 = scmp.ne.s32.totalorder %s57, %s58
      %p67 = scmp.eq.s32.totalorder %s26, 0
      %p68 = por %p66, %p67
      %p69 = scmp.ne.s32.totalorder %s57, %s58
      %p70 = scmp.eq.s32.totalorder %s27, 1
      %p71 = por %p69, %p70
      %p73 = scmp.ne.s32.totalorder %s58, %s72
      %p74 = scmp.eq.s32.totalorder %s27, 0
      %p75 = por %p73, %p74
      %s77 = sadd.s32 %s76, 1
      %p80 = scmp.eq.s32.totalorder %s21, 1
      %p81 = scmp.ne.s32.totalorder %s76, %s78
      %p82 = scmp.eq.s32.totalorder %s21, 0
      %p83 = por %p81, %p82
      %p84 = scmp.ne.s32.totalorder %s76, %s78
      %p85 = scmp.eq.s32.totalorder %s26, 1
      %p86 = por %p84, %p85
      %p87 = scmp.ne.s32.totalorder %s78, %s79
      %p88 = scmp.eq.s32.totalorder %s26, 0
      %p89 = por %p87, %p88
      %p90 = scmp.ne.s32.totalorder %s78, %s79
      %p91 = scmp.eq.s32.totalorder %s27, 1
      %p92 = por %p90, %p91
      %p94 = scmp.ne.s32.totalorder %s79, %s93
      %p95 = scmp.eq.s32.totalorder %s27, 0
      %p96 = por %p94, %p95
      %s98 = sadd.s32 %s97, 1
      %p101 = scmp.eq.s32.totalorder %s21, 1
      %p102 = scmp.ne.s32.totalorder %s97, %s99
      %p103 = scmp.eq.s32.totalorder %s21, 0
      %p104 = por %p102, %p103
      %p105 = scmp.ne.s32.totalorder %s97, %s99
      %p106 = scmp.eq.s32.totalorder %s26, 1
      %p107 = por %p105, %p106
      %p108 = scmp.ne.s32.totalorder %s99, %s100
      %p109 = scmp.eq.s32.totalorder %s26, 0
      %p110 = por %p108, %p109
      %p111 = scmp.ne.s32.totalorder %s99, %s100
      %p112 = scmp.eq.s32.totalorder %s27, 1
      %p113 = por %p111, %p112
      %p115 = scmp.ne.s32.totalorder %s100, %s114
      %p116 = scmp.eq.s32.totalorder %s27, 0
      %p117 = por %p115, %p116
      %s119 = sadd.s32 %s118, 1
      %p122 = scmp.eq.s32.totalorder %s21, 1
      %p123 = scmp.ne.s32.totalorder %s118, %s120
      %p124 = scmp.eq.s32.totalorder %s21, 0
      %p125 = por %p123, %p124
      %p126 = scmp.ne.s32.totalorder %s118, %s120
      %p127 = scmp.eq.s32.totalorder %s26, 1
      %p128 = por %p126, %p127
      %p129 = scmp.ne.s32.totalorder %s120, %s121
      %p130 = scmp.eq.s32.totalorder %s26, 0
      %p131 = por %p129, %p130
      %p132 = scmp.ne.s32.totalorder %s120, %s121
      %p133 = scmp.eq.s32.totalorder %s27, 1
      %p134 = por %p132, %p133
      %p136 = scmp.ne.s32.totalorder %s121, %s135
      %p137 = scmp.eq.s32.totalorder %s27, 0
      %p138 = por %p136, %p137
      %s140 = sadd.s32 %s139, 1
      %p143 = scmp.eq.s32.totalorder %s21, 1
      %p144 = scmp.ne.s32.totalorder %s139, %s141
      %p145 = scmp.eq.s32.totalorder %s21, 0
      %p146 = por %p144, %p145
      %p147 = scmp.ne.s32.totalorder %s139, %s141
      %p148 = scmp.eq.s32.totalorder %s26, 1
      %p149 = por %p147, %p148
      %p150 = scmp.ne.s32.totalorder %s141, %s142
      %p151 = scmp.eq.s32.totalorder %s26, 0
      %p152 = por %p150, %p151
      %p153 = scmp.ne.s32.totalorder %s141, %s142
      %p154 = scmp.eq.s32.totalorder %s27, 1
      %p155 = por %p153, %p154
      %p157 = scmp.ne.s32.totalorder %s142, %s156
      %p158 = scmp.eq.s32.totalorder %s27, 0
      %p159 = por %p157, %p158
      %s161 = sadd.s32 %s160, 1
      %p164 = scmp.eq.s32.totalorder %s21, 1
      %p165 = scmp.ne.s32.totalorder %s160, %s162
      %p166 = scmp.eq.s32.totalorder %s21, 0
      %p167 = por %p165, %p166
      %p168 = scmp.ne.s32.totalorder %s160, %s162
      %p169 = scmp.eq.s32.totalorder %s26, 1
      %p170 = por %p168, %p169
      %p171 = scmp.ne.s32.totalorder %s162, %s163
      %p172 = scmp.eq.s32.totalorder %s26, 0
      %p173 = por %p171, %p172
      %p174 = scmp.ne.s32.totalorder %s162, %s163
      %p175 = scmp.eq.s32.totalorder %s27, 1
      %p176 = por %p174, %p175
      %p178 = scmp.ne.s32.totalorder %s163, %s177
      %p179 = scmp.eq.s32.totalorder %s27, 0
      %p180 = por %p178, %p179
      %s181 = ssub.s32 %s21, %s28
      %p182 = scmp.eq.s32.totalorder %s181, 0
      %s184 = sadd.s32 %s183, 1
      %s185 = scalar_select %p182, %s183, %s184
      %p188 = pneg %p182
      %p189 = scmp.eq.s32.totalorder %s21, 1
      %p190 = por %p188, %p189
      %p191 = scmp.ne.s32.totalorder %s183, %s186
      %p192 = scmp.eq.s32.totalorder %s21, 0
      %p193 = por %p191, %p192
      %p194 = scmp.ne.s32.totalorder %s183, %s186
      %p195 = scmp.eq.s32.totalorder %s26, 1
      %p196 = por %p194, %p195
      %p197 = scmp.ne.s32.totalorder %s186, %s187
      %p198 = scmp.eq.s32.totalorder %s26, 0
      %p199 = por %p197, %p198
      %p200 = scmp.ne.s32.totalorder %s186, %s187
      %p201 = scmp.eq.s32.totalorder %s27, 1
      %p202 = por %p200, %p201
      %p204 = scmp.ne.s32.totalorder %s187, %s203
      %p205 = scmp.eq.s32.totalorder %s27, 0
      %p206 = por %p204, %p205
      %s207 = ssub.s32 %s21, %s28
      %p208 = scmp.eq.s32.totalorder %s207, 0
      %s210 = sadd.s32 %s209, 1
      %s211 = scalar_select %p208, %s209, %s210
      %p214 = pneg %p208
      %p215 = scmp.eq.s32.totalorder %s21, 1
      %p216 = por %p214, %p215
      %p217 = scmp.ne.s32.totalorder %s209, %s212
      %p218 = scmp.eq.s32.totalorder %s21, 0
      %p219 = por %p217, %p218
      %p220 = scmp.ne.s32.totalorder %s209, %s212
      %p221 = scmp.eq.s32.totalorder %s26, 1
      %p222 = por %p220, %p221
      %p223 = scmp.ne.s32.totalorder %s212, %s213
      %p224 = scmp.eq.s32.totalorder %s26, 0
      %p225 = por %p223, %p224
      %p226 = scmp.ne.s32.totalorder %s212, %s213
      %p227 = scmp.eq.s32.totalorder %s27, 1
      %p228 = por %p226, %p227
      %p230 = scmp.ne.s32.totalorder %s213, %s229
      %p231 = scmp.eq.s32.totalorder %s27, 0
      %p232 = por %p230, %p231
      %p233 = scmp.le.s32.totalorder 1, %s21
      %p234 = scmp.lt.s32.totalorder %s21, 3
      %p235 = pnand %p233, %p234
      %p236 = pneg %p235
      // Predicated region
      $region9: #{tpu_custom_call.1} parent=5 // pred_check
        _
      $region10: #{tpu_custom_call.1} parent=5 // pred_check_branch
        %238 = sbr.rel (%p235) target = $region12
      $region11: #{tpu_custom_call.1} parent=5 // pred_region
        %s239 = ssub.s32 %s21, 1
        // Predicated region
        $region13: #{tpu_custom_call.1} parent=11 // pred_check
          %p240 = pneg %p68
        $region14: #{tpu_custom_call.1} parent=11 // pred_check_branch
          %242 = sbr.rel (%p240) target = $region16
        $region15: #{tpu_custom_call.1} parent=11 // pred_region
          _
        $region16: #{tpu_custom_call.1} parent=11 // pred_fallthru
          _
        // Predicated region
        $region17: #{tpu_custom_call.1} parent=11 // pred_check
          %p243 = pneg %p89
        $region18: #{tpu_custom_call.1} parent=11 // pred_check_branch
          %245 = sbr.rel (%p243) target = $region20
        $region19: #{tpu_custom_call.1} parent=11 // pred_region
          _
        $region20: #{tpu_custom_call.1} parent=11 // pred_fallthru
          _
        // Predicated region
        $region21: #{tpu_custom_call.1} parent=11 // pred_check
          %p246 = pneg %p110
        $region22: #{tpu_custom_call.1} parent=11 // pred_check_branch
          %248 = sbr.rel (%p246) target = $region24
        $region23: #{tpu_custom_call.1} parent=11 // pred_region
          _
        $region24: #{tpu_custom_call.1} parent=11 // pred_fallthru
          _
        // Predicated region
        $region25: #{tpu_custom_call.1} parent=11 // pred_check
          %p249 = pneg %p131
        $region26: #{tpu_custom_call.1} parent=11 // pred_check_branch
          %251 = sbr.rel (%p249) target = $region28
        $region27: #{tpu_custom_call.1} parent=11 // pred_region
          _
        $region28: #{tpu_custom_call.1} parent=11 // pred_fallthru
          _
        // Predicated region
        $region29: #{tpu_custom_call.1} parent=11 // pred_check
          %p252 = pneg %p152
        $region30: #{tpu_custom_call.1} parent=11 // pred_check_branch
          %254 = sbr.rel (%p252) target = $region32
        $region31: #{tpu_custom_call.1} parent=11 // pred_region
          _
        $region32: #{tpu_custom_call.1} parent=11 // pred_fallthru
          _
        // Predicated region
        $region33: #{tpu_custom_call.1} parent=11 // pred_check
          %p255 = pneg %p173
        $region34: #{tpu_custom_call.1} parent=11 // pred_check_branch
          %257 = sbr.rel (%p255) target = $region36
        $region35: #{tpu_custom_call.1} parent=11 // pred_region
          _
        $region36: #{tpu_custom_call.1} parent=11 // pred_fallthru
          _
      $region12: #{tpu_custom_call.1} parent=5 // pred_fallthru
        _
      %p258 = scmp.lt.s32.totalorder %s21, 2
      // Predicated region
      $region37: #{tpu_custom_call.1} parent=5 // pred_check
        %p259 = pneg %p258
      $region38: #{tpu_custom_call.1} parent=5 // pred_check_branch
        %261 = sbr.rel (%p259) target = $region40
      $region39: #{tpu_custom_call.1} parent=5 // pred_region
        // Predicated region
        $region41: #{tpu_custom_call.1} parent=39 // pred_check
          %p262 = pneg %p41
        $region42: #{tpu_custom_call.1} parent=39 // pred_check_branch
          %264 = sbr.rel (%p262) target = $region44
        $region43: #{tpu_custom_call.1} parent=39 // pred_region
          %s265 = smul.u32 4, %s21
          %p266 = scmp.lt.s32.totalorder %s265, 7
          %s267 = scalar_select %p266, %s265, 7
          %s268 = smul.addr %s267, 8
          %s269 = scalar_lea.vmem %s0, %s268
          %s270 = smul.u32 4, %s21
        $region44: #{tpu_custom_call.1} parent=39 // pred_fallthru
          _
      $region40: #{tpu_custom_call.1} parent=5 // pred_fallthru
        _
      %p271 = scmp.le.s32.totalorder 1, %s21
      %p272 = scmp.lt.s32.totalorder %s21, 3
      %p273 = pnand %p271, %p272
      %p274 = pneg %p273
      // Predicated region
      $region45: #{tpu_custom_call.1} parent=5 // pred_check
        _
      $region46: #{tpu_custom_call.1} parent=5 // pred_check_branch
        %276 = sbr.rel (%p273) target = $region48
      $region47: #{tpu_custom_call.1} parent=5 // pred_region
        %s277 = ssub.s32 %s21, 1
        %s278 = smul.u32 4, %s26
        %p279 = scmp.lt.s32.totalorder %s278, 7
        %s280 = scalar_select %p279, %s278, 7
        %s281 = smul.addr %s280, 8
        %s282 = scalar_lea.vmem %s0, %s281
        %p283 = pneg %p47
        %p284 = pneg %p44
        %p285 = pneg %p68
        %p286 = pneg %p65
        %p287 = pneg %p89
        %p288 = pneg %p86
        %p289 = pneg %p110
        %p290 = pneg %p107
        %p291 = pneg %p131
        %p292 = pneg %p128
        %p293 = pneg %p152
        %p294 = pneg %p149
        %p295 = pneg %p173
        %p296 = pneg %p170
        %p297 = pneg %p199
        %p298 = pneg %p196
        %s299 = sand.u32 %s186, 1
        %s300 = scalar_lea.sflag [#allocation3], %s299
        %s301 = sand.u32 %s186, 1
        %s302 = smul.addr %s301, 32
        %s303 = scalar_lea.vmem [#allocation2], %s302
        %p304 = pneg %p225
        %p305 = pneg %p222
        %s306 = sand.u32 %s212, 1
        %s307 = scalar_lea.sflag [#allocation5], %s306
        %s308 = sand.u32 %s212, 1
        %s309 = smul.addr %s308, 32
        %s310 = scalar_lea.vmem [#allocation4], %s309
        %s311 = smul.u32 4, %s26
        %p312 = scmp.lt.s32.totalorder %s311, 7
        %s313 = scalar_select %p312, %s311, 7
        %s314 = smul.addr %s313, 8
        %s315 = scalar_lea.vmem %s0, %s314
        %s316 = smul.u32 4, %s26
        %s317 = smul.u32 4, %s26
        %s318 = smul.u32 4, %s26
        %v320 = vld [vmem:[%s315] sm:$0xff]
        %v321 = vld [vmem:[%s315 + $0x8] sm:$0xff]
        %v322 = vld [vmem:[%s315 + $0x10] sm:$0xff]
        %v323 = vld [vmem:[%s315 + $0x18] sm:$0xff]
        %v324 = vld [vmem:[%s1] sm:$0xf]
        %v325 = vld [vmem:[%s1 + $0x4] sm:$0xf]
        %v326 = vld [vmem:[%s1 + $0x8] sm:$0xf]
        %v327 = vld [vmem:[%s1 + $0xc] sm:$0xf]
        %v328 = vpack.c.bf16 %v320, %v320
        %v329 = vpack.c.bf16 %v321, %v321
        %v330 = vpack.c.bf16 %v322, %v322
        %v331 = vpack.c.bf16 %v323, %v323
        %v332 = vld [vmem:[%s2] sm:$0xff]
        %v333 = vld [vmem:[%s2 + $0x8] sm:$0xff]
        %v334 = vld [vmem:[%s2 + $0x10] sm:$0xff]
        %v335 = vld [vmem:[%s2 + $0x18] sm:$0xff]
        %337 = vset.pattern.permute.xlu0 0
        %338 = vperm.xlu0 %337, %v332
        %v339 = vpop.permute.xlu0 %338
        %342 = vset.pattern.permute.xlu0 0
        %343 = vperm.xlu0 %342, %v333
        %v344 = vpop.permute.xlu0 %343
        %347 = vset.pattern.permute.xlu0 0
        %348 = vperm.xlu0 %347, %v334
        %v349 = vpop.permute.xlu0 %348
        %352 = vset.pattern.permute.xlu0 0
        %353 = vperm.xlu0 %352, %v335
        %v354 = vpop.permute.xlu0 %353
        %v360 = vunpack.c.l.b16 %v324
        %v361 = vunpack.c.l.b16 %v325
        %v362 = vunpack.c.l.b16 %v326
        %v363 = vunpack.c.l.b16 %v327
        %v364 = vpack.c.b16 %v361, %v360
        %v365 = vpack.c.b16 %v363, %v362
        %vm366 = vcmask 64512
        %v368 = vsel %vm366, %v364, 0
        %v371 = vsel %vm366, %v365, 0
        %vm373 = vcmask 1043456
        %v375 = vsel %vm373, %v328, 0
        %v378 = vsel %vm373, %v329, 0
        %v381 = vsel %vm373, %v330, 0
        %v384 = vsel %vm373, %v331, 0
        %386 = vmatprep.subr.bf16.mxu0 %v378
        %387 = vmatpush1.bf16.msra.mxu0 %v375
        %388 = vmatprep.subr.bf16.mxu0 0
        %389 = vmatpush1.bf16.msra.mxu0 0
        %390 = vmatprep.subr.bf16.mxu0 0
        %391 = vmatpush1.bf16.msra.mxu0 0
        %392 = vmatprep.subr.bf16.mxu0 0
        %393 = vmatpush1.bf16.msra.mxu0 0
        %394 = vmatprep.subr.bf16.mxu0 0
        %395 = vmatpush1.bf16.msra.mxu0 0
        %396 = vmatprep.subr.bf16.mxu0 0
        %397 = vmatpush1.bf16.msra.mxu0 0
        %398 = vmatprep.subr.bf16.mxu0 0
        %399 = vmatpush1.bf16.msra.mxu0 0
        %400 = vmatprep.subr.bf16.mxu0 0
        %401 = vmatpush1.bf16.msra.mxu0 0
        %402 = vmatprep.subr.bf16.mxu0 0
        %403 = vmatpush1.bf16.msra.mxu0 0
        %404 = vmatprep.subr.bf16.mxu0 0
        %405 = vmatpush1.bf16.msra.mxu0 0
        %406 = vmatprep.subr.bf16.mxu0 0
        %407 = vmatpush1.bf16.msra.mxu0 0
        %408 = vmatprep.subr.bf16.mxu0 0
        %409 = vmatpush1.bf16.msra.mxu0 0
        %410 = vmatprep.subr.bf16.mxu0 0
        %411 = vmatpush1.bf16.msra.mxu0 0
        %412 = vmatprep.subr.bf16.mxu0 0
        %413 = vmatpush1.bf16.msra.mxu0 0
        %414 = vmatprep.subr.bf16.mxu0 0
        %415 = vmatpush1.bf16.msra.mxu0 0
        %416 = vmatprep.subr.bf16.mxu0 0
        %417 = vmatpush1.bf16.msra.mxu0 0
        %418 = vmatprep.mubr.bf16.mxu0 0
        %419 = vmatmul.mubr.bf16.gmra.mrb[0].mxu0 %v368
        %v420 = vpop.f32.mrb[0].mxu0
        %v421 = vadd.f32 %v339, %v420
        %v422 = vpop.f32.mrb[0].mxu0
        %v423 = vadd.f32 %v339, %v422
        %v424 = vpop.f32.mrb[0].mxu0
        %v425 = vadd.f32 %v344, %v424
        %v426 = vpop.f32.mrb[0].mxu0
        %v427 = vadd.f32 %v344, %v426
        %428 = vmatprep.mubr.bf16.mxu0 0
        %429 = vmatmul.mubr.bf16.gmra.mrb[0].mxu0 %v371
        %v430 = vpop.f32.mrb[0].mxu0
        %v431 = vadd.f32 %v349, %v430
        %v432 = vpop.f32.mrb[0].mxu0
        %v433 = vadd.f32 %v349, %v432
        %v434 = vpop.f32.mrb[0].mxu0
        %v435 = vadd.f32 %v354, %v434
        %v436 = vpop.f32.mrb[0].mxu0
        %v437 = vadd.f32 %v354, %v436
        %438 = vdwg.mxu0
        %439 = vmatprep.subr.bf16.mxu0 %v384
        %440 = vmatpush1.bf16.msra.mxu0 %v381
        %441 = vmatprep.subr.bf16.mxu0 0
        %442 = vmatpush1.bf16.msra.mxu0 0
        %443 = vmatprep.subr.bf16.mxu0 0
        %444 = vmatpush1.bf16.msra.mxu0 0
        %445 = vmatprep.subr.bf16.mxu0 0
        %446 = vmatpush1.bf16.msra.mxu0 0
        %447 = vmatprep.subr.bf16.mxu0 0
        %448 = vmatpush1.bf16.msra.mxu0 0
        %449 = vmatprep.subr.bf16.mxu0 0
        %450 = vmatpush1.bf16.msra.mxu0 0
        %451 = vmatprep.subr.bf16.mxu0 0
        %452 = vmatpush1.bf16.msra.mxu0 0
        %453 = vmatprep.subr.bf16.mxu0 0
        %454 = vmatpush1.bf16.msra.mxu0 0
        %455 = vmatprep.subr.bf16.mxu0 0
        %456 = vmatpush1.bf16.msra.mxu0 0
        %457 = vmatprep.subr.bf16.mxu0 0
        %458 = vmatpush1.bf16.msra.mxu0 0
        %459 = vmatprep.subr.bf16.mxu0 0
        %460 = vmatpush1.bf16.msra.mxu0 0
        %461 = vmatprep.subr.bf16.mxu0 0
        %462 = vmatpush1.bf16.msra.mxu0 0
        %463 = vmatprep.subr.bf16.mxu0 0
        %464 = vmatpush1.bf16.msra.mxu0 0
        %465 = vmatprep.subr.bf16.mxu0 0
        %466 = vmatpush1.bf16.msra.mxu0 0
        %467 = vmatprep.subr.bf16.mxu0 0
        %468 = vmatpush1.bf16.msra.mxu0 0
        %469 = vmatprep.subr.bf16.mxu0 0
        %470 = vmatpush1.bf16.msra.mxu0 0
        %471 = vmatprep.mubr.bf16.mxu0 0
        %472 = vmatmul.mubr.bf16.gmra.mrb[0].mxu0 %v368
        %v473 = vpop.f32.mrb[0].mxu0
        %v474 = vadd.f32 %v339, %v473
        %v475 = vpop.f32.mrb[0].mxu0
        %v476 = vadd.f32 %v339, %v475
        %v477 = vpop.f32.mrb[0].mxu0
        %v478 = vadd.f32 %v344, %v477
        %v479 = vpop.f32.mrb[0].mxu0
        %v480 = vadd.f32 %v344, %v479
        %481 = vmatprep.mubr.bf16.mxu0 0
        %482 = vmatmul.mubr.bf16.gmra.mrb[0].mxu0 %v371
        %v483 = vpop.f32.mrb[0].mxu0
        %v484 = vadd.f32 %v349, %v483
        %v485 = vpop.f32.mrb[0].mxu0
        %v486 = vadd.f32 %v349, %v485
        %v487 = vpop.f32.mrb[0].mxu0
        %v488 = vadd.f32 %v354, %v487
        %v489 = vpop.f32.mrb[0].mxu0
        %v490 = vadd.f32 %v354, %v489
        %491 = vdwg.mxu0
        %v492 = vmax.f32 %v421, 0.0
        %v493 = vmax.f32 %v423, 0.0
        %v494 = vmax.f32 %v474, 0.0
        %v495 = vmax.f32 %v476, 0.0
        %v496 = vmax.f32 %v425, 0.0
        %v497 = vmax.f32 %v427, 0.0
        %v498 = vmax.f32 %v478, 0.0
        %v499 = vmax.f32 %v480, 0.0
        %v500 = vmax.f32 %v431, 0.0
        %v501 = vmax.f32 %v433, 0.0
        %v502 = vmax.f32 %v484, 0.0
        %v503 = vmax.f32 %v486, 0.0
        %v504 = vmax.f32 %v435, 0.0
        %v505 = vmax.f32 %v437, 0.0
        %v506 = vmax.f32 %v488, 0.0
        %v507 = vmax.f32 %v490, 0.0
        %v508 = vpack.c.bf16 %v496, %v492
        %v509 = vpack.c.bf16 %v497, %v493
        %v510 = vpack.c.bf16 %v498, %v494
        %v511 = vpack.c.bf16 %v499, %v495
        %v512 = vpack.c.bf16 %v504, %v500
        %v513 = vpack.c.bf16 %v505, %v501
        %v514 = vpack.c.bf16 %v506, %v502
        %v515 = vpack.c.bf16 %v507, %v503
        %v516 = vld [vmem:[%s3] sm:$0xf]
        %v517 = vld [vmem:[%s3 + $0x4] sm:$0xf]
        %v518 = vld [vmem:[%s3 + $0x8] sm:$0xf]
        %v519 = vld [vmem:[%s3 + $0xc] sm:$0xf]
        %v520 = vld [vmem:[%s4] sm:$0xff]
        %v521 = vld [vmem:[%s4 + $0x8] sm:$0xff]
        %v522 = vld [vmem:[%s4 + $0x10] sm:$0xff]
        %v523 = vld [vmem:[%s4 + $0x18] sm:$0xff]
        %525 = vset.pattern.permute.xlu0 0
        %526 = vperm.xlu0 %525, %v520
        %v527 = vpop.permute.xlu0 %526
        %530 = vset.pattern.permute.xlu0 0
        %531 = vperm.xlu0 %530, %v521
        %v532 = vpop.permute.xlu0 %531
        %535 = vset.pattern.permute.xlu0 0
        %536 = vperm.xlu0 %535, %v522
        %v537 = vpop.permute.xlu0 %536
        %540 = vset.pattern.permute.xlu0 0
        %541 = vperm.xlu0 %540, %v523
        %v542 = vpop.permute.xlu0 %541
        %v548 = vunpack.c.l.b16 %v516
        %v549 = vunpack.c.l.b16 %v517
        %v550 = vunpack.c.l.b16 %v518
        %v551 = vunpack.c.l.b16 %v519
        %v552 = vpack.c.b16 %v549, %v548
        %v553 = vpack.c.b16 %v551, %v550
        %vm554 = vcmask 261120
        %v556 = vsel %vm554, %v552, 0
        %v559 = vsel %vm554, %v553, 0
        %561 = vmatprep.subr.bf16.mxu0 %v509
        %562 = vmatpush1.bf16.msra.mxu0 %v508
        %563 = vmatprep.subr.bf16.mxu0 %v513
        %564 = vmatpush1.bf16.msra.mxu0 %v512
        %565 = vmatprep.subr.bf16.mxu0 0
        %566 = vmatpush1.bf16.msra.mxu0 0
        %567 = vmatprep.subr.bf16.mxu0 0
        %568 = vmatpush1.bf16.msra.mxu0 0
        %569 = vmatprep.subr.bf16.mxu0 0
        %570 = vmatpush1.bf16.msra.mxu0 0
        %571 = vmatprep.subr.bf16.mxu0 0
        %572 = vmatpush1.bf16.msra.mxu0 0
        %573 = vmatprep.subr.bf16.mxu0 0
        %574 = vmatpush1.bf16.msra.mxu0 0
        %575 = vmatprep.subr.bf16.mxu0 0
        %576 = vmatpush1.bf16.msra.mxu0 0
        %577 = vmatprep.subr.bf16.mxu0 0
        %578 = vmatpush1.bf16.msra.mxu0 0
        %579 = vmatprep.subr.bf16.mxu0 0
        %580 = vmatpush1.bf16.msra.mxu0 0
        %581 = vmatprep.subr.bf16.mxu0 0
        %582 = vmatpush1.bf16.msra.mxu0 0
        %583 = vmatprep.subr.bf16.mxu0 0
        %584 = vmatpush1.bf16.msra.mxu0 0
        %585 = vmatprep.subr.bf16.mxu0 0
        %586 = vmatpush1.bf16.msra.mxu0 0
        %587 = vmatprep.subr.bf16.mxu0 0
        %588 = vmatpush1.bf16.msra.mxu0 0
        %589 = vmatprep.subr.bf16.mxu0 0
        %590 = vmatpush1.bf16.msra.mxu0 0
        %591 = vmatprep.subr.bf16.mxu0 0
        %592 = vmatpush1.bf16.msra.mxu0 0
        %593 = vmatprep.mubr.bf16.mxu0 0
        %594 = vmatmul.mubr.bf16.gmra.mrb[0].mxu0 %v556
        %v595 = vpop.f32.mrb[0].mxu0
        %v596 = vadd.f32 %v527, %v595
        %v597 = vpop.f32.mrb[0].mxu0
        %v598 = vadd.f32 %v527, %v597
        %v599 = vpop.f32.mrb[0].mxu0
        %v600 = vadd.f32 %v532, %v599
        %v601 = vpop.f32.mrb[0].mxu0
        %v602 = vadd.f32 %v532, %v601
        %603 = vmatprep.mubr.bf16.mxu0 0
        %604 = vmatmul.mubr.bf16.gmra.mrb[0].mxu0 %v559
        %v605 = vpop.f32.mrb[0].mxu0
        %v606 = vadd.f32 %v537, %v605
        %v607 = vpop.f32.mrb[0].mxu0
        %v608 = vadd.f32 %v537, %v607
        %v609 = vpop.f32.mrb[0].mxu0
        %v610 = vadd.f32 %v542, %v609
        %v611 = vpop.f32.mrb[0].mxu0
        %v612 = vadd.f32 %v542, %v611
        %613 = vdwg.mxu0
        %614 = vmatprep.subr.bf16.mxu0 %v511
        %615 = vmatpush1.bf16.msra.mxu0 %v510
        %616 = vmatprep.subr.bf16.mxu0 %v515
        %617 = vmatpush1.bf16.msra.mxu0 %v514
        %618 = vmatprep.subr.bf16.mxu0 0
        %619 = vmatpush1.bf16.msra.mxu0 0
        %620 = vmatprep.subr.bf16.mxu0 0
        %621 = vmatpush1.bf16.msra.mxu0 0
        %622 = vmatprep.subr.bf16.mxu0 0
        %623 = vmatpush1.bf16.msra.mxu0 0
        %624 = vmatprep.subr.bf16.mxu0 0
        %625 = vmatpush1.bf16.msra.mxu0 0
        %626 = vmatprep.subr.bf16.mxu0 0
        %627 = vmatpush1.bf16.msra.mxu0 0
        %628 = vmatprep.subr.bf16.mxu0 0
        %629 = vmatpush1.bf16.msra.mxu0 0
        %630 = vmatprep.subr.bf16.mxu0 0
        %631 = vmatpush1.bf16.msra.mxu0 0
        %632 = vmatprep.subr.bf16.mxu0 0
        %633 = vmatpush1.bf16.msra.mxu0 0
        %634 = vmatprep.subr.bf16.mxu0 0
        %635 = vmatpush1.bf16.msra.mxu0 0
        %636 = vmatprep.subr.bf16.mxu0 0
        %637 = vmatpush1.bf16.msra.mxu0 0
        %638 = vmatprep.subr.bf16.mxu0 0
        %639 = vmatpush1.bf16.msra.mxu0 0
        %640 = vmatprep.subr.bf16.mxu0 0
        %641 = vmatpush1.bf16.msra.mxu0 0
        %642 = vmatprep.subr.bf16.mxu0 0
        %643 = vmatpush1.bf16.msra.mxu0 0
        %644 = vmatprep.subr.bf16.mxu0 0
        %645 = vmatpush1.bf16.msra.mxu0 0
        %646 = vmatprep.mubr.bf16.mxu0 0
        %647 = vmatmul.mubr.bf16.gmra.mrb[0].mxu0 %v556
        %v648 = vpop.f32.mrb[0].mxu0
        %v649 = vadd.f32 %v527, %v648
        %v650 = vpop.f32.mrb[0].mxu0
        %v651 = vadd.f32 %v527, %v650
        %v652 = vpop.f32.mrb[0].mxu0
        %v653 = vadd.f32 %v532, %v652
        %v654 = vpop.f32.mrb[0].mxu0
        %v655 = vadd.f32 %v532, %v654
        %656 = vmatprep.mubr.bf16.mxu0 0
        %657 = vmatmul.mubr.bf16.gmra.mrb[0].mxu0 %v559
        %v658 = vpop.f32.mrb[0].mxu0
        %v659 = vadd.f32 %v537, %v658
        %v660 = vpop.f32.mrb[0].mxu0
        %v661 = vadd.f32 %v537, %v660
        %v662 = vpop.f32.mrb[0].mxu0
        %v663 = vadd.f32 %v542, %v662
        %v664 = vpop.f32.mrb[0].mxu0
        %v665 = vadd.f32 %v542, %v664
        %666 = vdwg.mxu0
        %v667 = vmax.f32 %v596, 0.0
        %v668 = vmax.f32 %v598, 0.0
        %v669 = vmax.f32 %v649, 0.0
        %v670 = vmax.f32 %v651, 0.0
        %v671 = vmax.f32 %v600, 0.0
        %v672 = vmax.f32 %v602, 0.0
        %v673 = vmax.f32 %v653, 0.0
        %v674 = vmax.f32 %v655, 0.0
        %v675 = vmax.f32 %v606, 0.0
        %v676 = vmax.f32 %v608, 0.0
        %v677 = vmax.f32 %v659, 0.0
        %v678 = vmax.f32 %v661, 0.0
        %v679 = vmax.f32 %v610, 0.0
        %v680 = vmax.f32 %v612, 0.0
        %v681 = vmax.f32 %v663, 0.0
        %v682 = vmax.f32 %v665, 0.0
        %v683 = vpack.c.bf16 %v671, %v667
        %v684 = vpack.c.bf16 %v672, %v668
        %v685 = vpack.c.bf16 %v673, %v669
        %v686 = vpack.c.bf16 %v674, %v670
        %v687 = vpack.c.bf16 %v679, %v675
        %v688 = vpack.c.bf16 %v680, %v676
        %v689 = vpack.c.bf16 %v681, %v677
        %v690 = vpack.c.bf16 %v682, %v678
        %v691 = vld [vmem:[%s5] sm:$0xf]
        %v692 = vld [vmem:[%s5 + $0x4] sm:$0xf]
        %v693 = vld [vmem:[%s6] sm:$0xff]
        %v694 = vld [vmem:[%s6 + $0x8] sm:$0xff]
        %696 = vset.pattern.permute.xlu0 0
        %697 = vperm.xlu0 %696, %v693
        %v698 = vpop.permute.xlu0 %697
        %701 = vset.pattern.permute.xlu0 0
        %702 = vperm.xlu0 %701, %v694
        %v703 = vpop.permute.xlu0 %702
        %v707 = vunpack.c.l.b16 %v691
        %v708 = vunpack.c.l.b16 %v692
        %v709 = vpack.c.b16 %v708, %v707
        %v711 = vsel %vm554, %v709, 0
        %713 = vmatprep.subr.bf16.mxu0 %v684
        %714 = vmatpush1.bf16.msra.mxu0 %v683
        %715 = vmatprep.subr.bf16.mxu0 %v688
        %716 = vmatpush1.bf16.msra.mxu0 %v687
        %717 = vmatprep.subr.bf16.mxu0 0
        %718 = vmatpush1.bf16.msra.mxu0 0
        %719 = vmatprep.subr.bf16.mxu0 0
        %720 = vmatpush1.bf16.msra.mxu0 0
        %721 = vmatprep.subr.bf16.mxu0 0
        %722 = vmatpush1.bf16.msra.mxu0 0
        %723 = vmatprep.subr.bf16.mxu0 0
        %724 = vmatpush1.bf16.msra.mxu0 0
        %725 = vmatprep.subr.bf16.mxu0 0
        %726 = vmatpush1.bf16.msra.mxu0 0
        %727 = vmatprep.subr.bf16.mxu0 0
        %728 = vmatpush1.bf16.msra.mxu0 0
        %729 = vmatprep.subr.bf16.mxu0 0
        %730 = vmatpush1.bf16.msra.mxu0 0
        %731 = vmatprep.subr.bf16.mxu0 0
        %732 = vmatpush1.bf16.msra.mxu0 0
        %733 = vmatprep.subr.bf16.mxu0 0
        %734 = vmatpush1.bf16.msra.mxu0 0
        %735 = vmatprep.subr.bf16.mxu0 0
        %736 = vmatpush1.bf16.msra.mxu0 0
        %737 = vmatprep.subr.bf16.mxu0 0
        %738 = vmatpush1.bf16.msra.mxu0 0
        %739 = vmatprep.subr.bf16.mxu0 0
        %740 = vmatpush1.bf16.msra.mxu0 0
        %741 = vmatprep.subr.bf16.mxu0 0
        %742 = vmatpush1.bf16.msra.mxu0 0
        %743 = vmatprep.subr.bf16.mxu0 0
        %744 = vmatpush1.bf16.msra.mxu0 0
        %745 = vmatprep.mubr.bf16.mxu0 0
        %746 = vmatmul.mubr.bf16.gmra.mrb[0].mxu0 %v711
        %v747 = vpop.f32.mrb[0].mxu0
        %v748 = vadd.f32 %v698, %v747
        %v749 = vpop.f32.mrb[0].mxu0
        %v750 = vadd.f32 %v698, %v749
        %v751 = vpop.f32.mrb[0].mxu0
        %v752 = vadd.f32 %v703, %v751
        %v753 = vpop.f32.mrb[0].mxu0
        %v754 = vadd.f32 %v703, %v753
        %755 = vdwg.mxu0
        %756 = vmatprep.subr.bf16.mxu0 %v686
        %757 = vmatpush1.bf16.msra.mxu0 %v685
        %758 = vmatprep.subr.bf16.mxu0 %v690
        %759 = vmatpush1.bf16.msra.mxu0 %v689
        %760 = vmatprep.subr.bf16.mxu0 0
        %761 = vmatpush1.bf16.msra.mxu0 0
        %762 = vmatprep.subr.bf16.mxu0 0
        %763 = vmatpush1.bf16.msra.mxu0 0
        %764 = vmatprep.subr.bf16.mxu0 0
        %765 = vmatpush1.bf16.msra.mxu0 0
        %766 = vmatprep.subr.bf16.mxu0 0
        %767 = vmatpush1.bf16.msra.mxu0 0
        %768 = vmatprep.subr.bf16.mxu0 0
        %769 = vmatpush1.bf16.msra.mxu0 0
        %770 = vmatprep.subr.bf16.mxu0 0
        %771 = vmatpush1.bf16.msra.mxu0 0
        %772 = vmatprep.subr.bf16.mxu0 0
        %773 = vmatpush1.bf16.msra.mxu0 0
        %774 = vmatprep.subr.bf16.mxu0 0
        %775 = vmatpush1.bf16.msra.mxu0 0
        %776 = vmatprep.subr.bf16.mxu0 0
        %777 = vmatpush1.bf16.msra.mxu0 0
        %778 = vmatprep.subr.bf16.mxu0 0
        %779 = vmatpush1.bf16.msra.mxu0 0
        %780 = vmatprep.subr.bf16.mxu0 0
        %781 = vmatpush1.bf16.msra.mxu0 0
        %782 = vmatprep.subr.bf16.mxu0 0
        %783 = vmatpush1.bf16.msra.mxu0 0
        %784 = vmatprep.subr.bf16.mxu0 0
        %785 = vmatpush1.bf16.msra.mxu0 0
        %786 = vmatprep.subr.bf16.mxu0 0
        %787 = vmatpush1.bf16.msra.mxu0 0
        %788 = vmatprep.mubr.bf16.mxu0 0
        %789 = vmatmul.mubr.bf16.gmra.mrb[0].mxu0 %v711
        %v790 = vpop.f32.mrb[0].mxu0
        %v791 = vadd.f32 %v698, %v790
        %v792 = vpop.f32.mrb[0].mxu0
        %v793 = vadd.f32 %v698, %v792
        %v794 = vpop.f32.mrb[0].mxu0
        %v795 = vadd.f32 %v703, %v794
        %v796 = vpop.f32.mrb[0].mxu0
        %v797 = vadd.f32 %v703, %v796
        %798 = vdwg.mxu0
        %v799 = vsub.f32 0.0, %v752
        %v800 = vsub.f32 0.0, %v754
        %v801 = vsub.f32 0.0, %v795
        %v802 = vsub.f32 0.0, %v797
        %v803 = vsub.f32 %v320, %v748
        %v804 = vsub.f32 %v321, %v750
        %v805 = vsub.f32 %v322, %v791
        %v806 = vsub.f32 %v323, %v793
        %v807 = vmul.f32 %v799, 1.442695
        %v808 = vpow.pop %v807
        %v809 = vmul.f32 %v800, 1.442695
        %v810 = vpow.pop %v809
        %v811 = vmul.f32 %v801, 1.442695
        %v812 = vpow.pop %v811
        %v813 = vmul.f32 %v802, 1.442695
        %v814 = vpow.pop %v813
        %v815 = vmul.f32 %v803, %v808
        %v816 = vmul.f32 %v804, %v810
        %v817 = vmul.f32 %v805, %v812
        %v818 = vmul.f32 %v806, %v814
        %819 = vst [vmem:[%s303] sm:$0xff] %v815
        %820 = vst [vmem:[%s303 + $0x8] sm:$0xff] %v816
        %821 = vst [vmem:[%s303 + $0x10] sm:$0xff] %v817
        %822 = vst [vmem:[%s303 + $0x18] sm:$0xff] %v818
        %823 = vst [vmem:[%s310] sm:$0xff] %v799
        %824 = vst [vmem:[%s310 + $0x8] sm:$0xff] %v800
        %825 = vst [vmem:[%s310 + $0x10] sm:$0xff] %v801
        %826 = vst [vmem:[%s310 + $0x18] sm:$0xff] %v802
        %s827 = sand.u32 %s186, 1
        %s828 = scalar_lea.sflag [#allocation3], %s827
        %s829 = sand.u32 %s186, 1
        %s830 = smul.addr %s829, 32
        %s831 = scalar_lea.vmem [#allocation2], %s830
        %s832 = sand.u32 %s212, 1
        %s833 = scalar_lea.sflag [#allocation5], %s832
        %s834 = sand.u32 %s212, 1
        %s835 = smul.addr %s834, 32
        %s836 = scalar_lea.vmem [#allocation4], %s835
        // Predicated region
        $region49: #{tpu_custom_call.1} parent=47 // pred_check
          %p837 = pneg %p196
        $region50: #{tpu_custom_call.1} parent=47 // pred_check_branch
          %839 = sbr.rel (%p837) target = $region52
        $region51: #{tpu_custom_call.1} parent=47 // pred_region
          %s840 = smul.u32 4, %s26
          %s842 = ssub.s32 512, 512
          %843 = vsyncadd %s828, %s842
          %s844 = smul.addr %s840, 128
          %s845 = scalar_lea.hbm %s7, %s844
          %s847 = sshll.u32 %s831, 4
          %s848 = int_to_ptr.vmem [resolvable:$true] %s847
          %850 = dma.vmem_to_hbm [thread:$0]  %s848, 512, %s845, %s828
        $region52: #{tpu_custom_call.1} parent=47 // pred_fallthru
          _
        // Predicated region
        $region53: #{tpu_custom_call.1} parent=47 // pred_check
          %p851 = pneg %p222
        $region54: #{tpu_custom_call.1} parent=47 // pred_check_branch
          %853 = sbr.rel (%p851) target = $region56
        $region55: #{tpu_custom_call.1} parent=47 // pred_region
          %s854 = smul.u32 4, %s26
          %s856 = ssub.s32 512, 512
          %857 = vsyncadd %s833, %s856
          %s858 = smul.addr %s854, 128
          %s859 = scalar_lea.hbm %s8, %s858
          %s861 = sshll.u32 %s836, 4
          %s862 = int_to_ptr.vmem [resolvable:$true] %s861
          %864 = dma.vmem_to_hbm [thread:$0]  %s862, 512, %s859, %s833
        $region56: #{tpu_custom_call.1} parent=47 // pred_fallthru
          _
      $region48: #{tpu_custom_call.1} parent=5 // pred_fallthru
        _
      %p865 = scmp.le.s32.totalorder 2, %s21
      // Predicated region
      $region57: #{tpu_custom_call.1} parent=5 // pred_check
        %p866 = pneg %p865
      $region58: #{tpu_custom_call.1} parent=5 // pred_check_branch
        %868 = sbr.rel (%p866) target = $region60
      $region59: #{tpu_custom_call.1} parent=5 // pred_region
        %s869 = ssub.s32 %s21, 2
        // Predicated region
        $region61: #{tpu_custom_call.1} parent=59 // pred_check
          %p870 = pneg %p202
        $region62: #{tpu_custom_call.1} parent=59 // pred_check_branch
          %872 = sbr.rel (%p870) target = $region64
        $region63: #{tpu_custom_call.1} parent=59 // pred_region
          %s873 = sand.u32 %s187, 1
          %s874 = scalar_lea.sflag [#allocation3], %s873
          %s875 = sand.u32 %s187, 1
          %s876 = smul.addr %s875, 32
          %s877 = scalar_lea.vmem [#allocation2], %s876
          %878 = dma.done %s874, 512
        $region64: #{tpu_custom_call.1} parent=59 // pred_fallthru
          _
        // Predicated region
        $region65: #{tpu_custom_call.1} parent=59 // pred_check
          %p879 = pneg %p228
        $region66: #{tpu_custom_call.1} parent=59 // pred_check_branch
          %881 = sbr.rel (%p879) target = $region68
        $region67: #{tpu_custom_call.1} parent=59 // pred_region
          %s882 = sand.u32 %s213, 1
          %s883 = scalar_lea.sflag [#allocation5], %s882
          %s884 = sand.u32 %s213, 1
          %s885 = smul.addr %s884, 32
          %s886 = scalar_lea.vmem [#allocation4], %s885
          %887 = dma.done %s883, 512
        $region68: #{tpu_custom_call.1} parent=59 // pred_fallthru
          _
      $region60: #{tpu_custom_call.1} parent=5 // pred_fallthru
        _
    $region6: #{tpu_custom_call.1} parent=1 // loop_footer
      %s25 = sadd.s32 1, %s21
    $region7: #{tpu_custom_call.1} parent=1 // loop_footer_branch
      %20 = sbr.rel target = $region3
    $region8: #{tpu_custom_call.1} parent=1 // loop_exit
      _
    %888 = vsyncpa [#allocation3], 1
    %s889 = scalar_lea.sflag [#allocation3], 1
    %890 = vsyncpa %s889, 1
    %891 = vsyncpa [#allocation5], 1
    %s892 = scalar_lea.sflag [#allocation5], 1
    %893 = vsyncpa %s892, 1

</llo_original>
